<compile_context>
chip_gen: v5e
topology: v5e:2x2
jax: 0.10.0
libtpu: 0.0.40
codegen_flags: <defaults>
</compile_context>

<pallas_src>
import jax
import jax.numpy as jnp
from jax import lax
from jax.experimental import pallas as pl
from jax.experimental.pallas import tpu as pltpu


def _round_up(x, m):
    return (x + m - 1) // m * m


def _make_dice_partial_kernel(block_m, lane_w, chunk_m, rows, nblocks):
    """Kernel producing per-block partial sums.

    Output block is (1, 8, 128) f32; sublane 0 carries the partial
    sum(input*target), sublane 1 carries the partial (sum(input)+sum(target)).
    """
    n_chunks = block_m // chunk_m
    tail_rows = rows - (nblocks - 1) * block_m   # valid rows in the last block
    has_tail = tail_rows < block_m               # static Python bool

    def kernel(t_ref, x_ref, o_ref):
        is_last = pl.program_id(0) == nblocks - 1

        def chunk_sums(r0, carry):
            num, den = carry
            t = t_ref[pl.ds(r0, chunk_m), :].astype(jnp.float32)
            x = x_ref[pl.ds(r0, chunk_m), :].astype(jnp.float32)
            prod = x * t          # intersection term
            ssum = x + t          # fused denominator: sum(x)+sum(t) == sum(x+t)
            if has_tail:
                # Pallas does not zero-fill the overhanging region of the last
                # (partial) block -> mask garbage rows out of both reductions.
                row = r0 + lax.broadcasted_iota(jnp.int32, (chunk_m, lane_w), 0)
                valid = jnp.where(is_last, tail_rows, block_m)
                keep = row < valid
                prod = jnp.where(keep, prod, 0.0)
                ssum = jnp.where(keep, ssum, 0.0)
            return num + jnp.sum(prod), den + jnp.sum(ssum)

        zero = (jnp.zeros((), jnp.float32), jnp.zeros((), jnp.float32))
        if n_chunks == 1:
            num, den = chunk_sums(0, zero)
        else:
            num, den = lax.fori_loop(
                0, n_chunks,
                lambda c, carry: chunk_sums(
                    pl.multiple_of(c * chunk_m, chunk_m), carry),
                zero,
                unroll=True)

        # Lane-dense, full-vreg (unmasked) store of the two partial sums.
        out_row = lax.broadcasted_iota(jnp.int32, (1, 8, 128), 1)
        o_ref[...] = jnp.where(out_row == 0, num,
                               jnp.where(out_row == 1, den, 0.0))

    return kernel


def dice_loss(target, inp, *, interpret=False):
    """Dice loss: 1 - (2*sum(x*t)+1) / (sum(x)+sum(t)+1).

    target, inp: arrays of identical shape (e.g. NCHW), any float dtype.
    Passing bf16 (target is a 0/1 mask) halves HBM traffic; accumulation is
    always f32 inside the kernel.
    """
    assert target.shape == inp.shape, (target.shape, inp.shape)

    total = 1
    for d in target.shape:
        total *= d

    t1 = target.reshape(-1)
    x1 = inp.reshape(-1)

    # Widest lane count that divides the element count -> no padding copy in
    # the common case.
    lane_w = None
    for lw in (512, 256, 128):
        if total % lw == 0:
            lane_w = lw
            break
    if lane_w is None:
        # Rare fallback: pad by < 128 zeros (neutral for all three sums).
        lane_w = 128
        padded = _round_up(total, lane_w)
        t1 = jnp.pad(t1, (0, padded - total))
        x1 = jnp.pad(x1, (0, padded - total))
        total = padded

    rows = total // lane_w
    t2 = t1.reshape(rows, lane_w)
    x2 = x1.reshape(rows, lane_w)

    # Block sizing: ~1M elems (~4 MiB f32) per input per grid step, chunked
    # reductions of ~128K elems (~0.5 MiB f32), and >= 2 blocks whenever there
    # is enough data so both v7x TensorCores get work.
    target_block_rows = (1 << 20) // lane_w          # 2048 / 4096 / 8192
    chunk_rows = max(8, (128 * 1024) // lane_w)      # 256 / 512 / 1024
    if rows <= chunk_rows:
        block_m = rows          # single block; block dim == full array dim
        chunk_m = rows
    else:
        half = _round_up(pl.cdiv(rows, 2), chunk_rows)
        block_m = min(target_block_rows, half)       # multiple of chunk_rows
        chunk_m = chunk_rows

    nblocks = pl.cdiv(rows, block_m)

    kernel = _make_dice_partial_kernel(block_m, lane_w, chunk_m, rows, nblocks)

    partials = pl.pallas_call(
        kernel,
        out_shape=jax.ShapeDtypeStruct((nblocks, 8, 128), jnp.float32),
        grid_spec=pltpu.PrefetchScalarGridSpec(
            num_scalar_prefetch=0,
            grid=(nblocks,),
            in_specs=[
                pl.BlockSpec((block_m, lane_w), lambda i: (i, 0)),
                pl.BlockSpec((block_m, lane_w), lambda i: (i, 0)),
            ],
            out_specs=pl.BlockSpec((1, 8, 128), lambda i: (i, 0, 0)),
        ),
        compiler_params=pltpu.CompilerParams(
            # No carried state -> disjoint output blocks -> megacore-shardable.
            dimension_semantics=("parallel",),
            # 16 MiB double-buffered inputs + small chunk temps; fits v7x too.
            vmem_limit_bytes=32 * 1024 * 1024,
        ),
        interpret=interpret,
    )(t2, x2)

    # Tiny final reduction over per-block partials (plain JAX).
    num = jnp.sum(partials[:, 0, 0])
    den = jnp.sum(partials[:, 1, 0])
    smooth = jnp.float32(1.0)
    loss = (2.0 * num + smooth) / (den + smooth)
    return (1.0 - loss).astype(jnp.float32)


def dice_loss_ref(target, inp):
    N = target.shape[0]
    smooth = 1.0
    x = inp.reshape(N, -1).astype(jnp.float32)
    t = target.reshape(N, -1).astype(jnp.float32)
    inter = jnp.sum(x * t)
    loss = (2.0 * inter + smooth) / (jnp.sum(x) + jnp.sum(t) + smooth)
    return 1.0 - loss


if __name__ == "__main__":
    key = jax.random.PRNGKey(0)
    k1, k2, k3, k4 = jax.random.split(key, 4)

    # Primary check — NCHW: batch=2, channels=4, spatial=16x16 (no-pad path).
    inp = jax.random.uniform(k1, (2, 4, 16, 16), dtype=jnp.float32)
    target = (jax.random.uniform(k2, (2, 4, 16, 16)) > 0.5).astype(jnp.float32)
    out = jax.block_until_ready(dice_loss(target, inp))
    ref = dice_loss_ref(target, inp)
    assert jnp.allclose(out, ref, atol=1e-5, rtol=1e-4), (out, ref)

    # Secondary check — larger shape exercising the multi-block grid and the
    # in-kernel tail mask of the overhanging last block.
    inp2 = jax.random.uniform(k3, (2, 4, 160, 160), dtype=jnp.float32)
    target2 = (jax.random.uniform(k4, (2, 4, 160, 160)) > 0.5).astype(jnp.float32)
    out2 = jax.block_until_ready(dice_loss(target2, inp2))
    ref2 = dice_loss_ref(target2, inp2)
    assert jnp.allclose(out2, ref2, atol=1e-5, rtol=1e-4), (out2, ref2)

    print("KERNEL_OK")
</pallas_src>

<mosaic_0001>
module attributes {stable_mosaic.version = 11 : i64} {
  func.func @kernel(%arg0: i32, %arg1: memref<4x512xf32, #tpu.memory_space<vmem>>, %arg2: memref<4x512xf32, #tpu.memory_space<vmem>>, %arg3: memref<1x8x128xf32, #tpu.memory_space<vmem>>) attributes {dimension_semantics = [#tpu.dimension_semantics<parallel>], iteration_bounds = array<i64: 1>, scalar_prefetch = 0 : i64, scratch_operands = 0 : i64, tpu.core_type = #tpu.core_type<tc>, window_params = [{transform_indices = @transform_0, window_bounds = array<i64: 4, 512>}, {transform_indices = @transform_1, window_bounds = array<i64: 4, 512>}, {transform_indices = @transform_2, window_bounds = array<i64: 1, 8, 128>}]} {
    %c0 = arith.constant 0 : index
    %c0_0 = arith.constant 0 : index
    %0 = vector.load %arg1[%c0, %c0_0] : memref<4x512xf32, #tpu.memory_space<vmem>>, vector<4x512xf32>
    %c0_1 = arith.constant 0 : index
    %c0_2 = arith.constant 0 : index
    %1 = vector.load %arg2[%c0_1, %c0_2] : memref<4x512xf32, #tpu.memory_space<vmem>>, vector<4x512xf32>
    %2 = arith.mulf %1, %0 : vector<4x512xf32>
    %3 = arith.addf %1, %0 : vector<4x512xf32>
    %4 = vector.shape_cast %2 : vector<4x512xf32> to vector<1x4x512xf32>
    %cst = arith.constant dense<0.000000e+00> : vector<1xf32>
    %5 = vector.multi_reduction <add>, %4, %cst [1, 2] : vector<1x4x512xf32> to vector<1xf32>
    %6 = vector.shape_cast %5 : vector<1xf32> to vector<1x1x1xf32>
    %7 = vector.extract %6[0, 0, 0] : f32 from vector<1x1x1xf32>
    %cst_3 = arith.constant 0.000000e+00 : f32
    %8 = arith.addf %cst_3, %7 : f32
    %9 = vector.shape_cast %3 : vector<4x512xf32> to vector<1x4x512xf32>
    %cst_4 = arith.constant dense<0.000000e+00> : vector<1xf32>
    %10 = vector.multi_reduction <add>, %9, %cst_4 [1, 2] : vector<1x4x512xf32> to vector<1xf32>
    %11 = vector.shape_cast %10 : vector<1xf32> to vector<1x1x1xf32>
    %12 = vector.extract %11[0, 0, 0] : f32 from vector<1x1x1xf32>
    %cst_5 = arith.constant 0.000000e+00 : f32
    %13 = arith.addf %cst_5, %12 : f32
    %14 = tpu.iota {dimensions = array<i32: 1>} : vector<1x8x128xi32>
    %c0_i32 = arith.constant 0 : i32
    %15 = vector.broadcast %c0_i32 : i32 to vector<1x8x128xi32>
    %16 = arith.cmpi eq, %14, %15 : vector<1x8x128xi32>
    %c1_i32 = arith.constant 1 : i32
    %17 = vector.broadcast %c1_i32 : i32 to vector<1x8x128xi32>
    %18 = arith.cmpi eq, %14, %17 : vector<1x8x128xi32>
    %cst_6 = arith.constant 0.000000e+00 : f32
    %19 = vector.broadcast %13 : f32 to vector<1x8x128xf32>
    %20 = vector.broadcast %cst_6 : f32 to vector<1x8x128xf32>
    %21 = arith.select %18, %19, %20 : vector<1x8x128xi1>, vector<1x8x128xf32>
    %22 = vector.broadcast %8 : f32 to vector<1x8x128xf32>
    %23 = arith.select %16, %22, %21 : vector<1x8x128xi1>, vector<1x8x128xf32>
    %c0_7 = arith.constant 0 : index
    %c0_8 = arith.constant 0 : index
    %c0_9 = arith.constant 0 : index
    %24 = vector.load %arg3[%c0_7, %c0_8, %c0_9] : memref<1x8x128xf32, #tpu.memory_space<vmem>>, vector<1x8x128xf32>
    tpu.vector_store %arg3[%c0_7, %c0_8, %c0_9], %23 {strides = array<i32>} : memref<1x8x128xf32, #tpu.memory_space<vmem>>, vector<1x8x128xf32>,
    return
  }
  func.func @transform_0(%arg0: i32) -> (i32, i32) {
    %c0_i32 = arith.constant 0 : i32
    %c0_i32_0 = arith.constant 0 : i32
    return %arg0, %c0_i32 : i32, i32
  }
  func.func @transform_1(%arg0: i32) -> (i32, i32) {
    %c0_i32 = arith.constant 0 : i32
    %c0_i32_0 = arith.constant 0 : i32
    return %arg0, %c0_i32 : i32, i32
  }
  func.func @transform_2(%arg0: i32) -> (i32, i32, i32) {
    %c0_i32 = arith.constant 0 : i32
    %c0_i32_0 = arith.constant 0 : i32
    %c0_i32_1 = arith.constant 0 : i32
    return %arg0, %c0_i32, %c0_i32_0 : i32, i32, i32
  }
}

</mosaic_0001>

<llo_original>
// kernel: tpu_custom_call.1
$region0: #{tpu_custom_call.1}
  #allocation0 [shape = 'u32[]', space=smem, size = 0x4, offset = 0x4, fixed_abs, tag = 'smem constant byte address 0x4 - core index']
  #allocation1 [shape = 'u32[72,128]{1,0:T(1,128)}', space=vmem, size = 0x9000, scoped, tag = 'internal scratch']
  %s0 = inlined_call_operand.hbm [shape: f32[4,512], index: 0, kind: input, shape index: {}]
  %s1 = inlined_call_operand.hbm [shape: f32[4,512], index: 1, kind: input, shape index: {}]
  %s2 = inlined_call_operand.hbm [shape: f32[1,8,128], index: 2, kind: output, shape index: {}]
  %s3 = sld [smem:[#allocation0]]
  $region26: #{tpu_custom_call.1} parent=0
    _
  %s5 = ssub.s32 1, %s3
  %s6 = scalar_select 0, %s5, %s3
  $region1: #{tpu_custom_call.1} parent=0
    #allocation2 [shape = 'u8[8192]{0}', space=vmem, size = 0x2000, scoped, tag = 'input window, operand 0, single buffered']
    #allocation3 [shape = 's32[1]{0}', space=sflag, size = 0x4, scoped, tag = 'scoped memory for tpu_custom_call.1']
    #allocation4 [shape = 's32[1]{0}', space=sflag, size = 0x4, scoped, tag = 'scoped memory for tpu_custom_call.1']
    #allocation5 [shape = 'u8[8192]{0}', space=vmem, size = 0x2000, scoped, tag = 'input window, operand 1, single buffered']
    #allocation6 [shape = 's32[1]{0}', space=sflag, size = 0x4, scoped, tag = 'scoped memory for tpu_custom_call.1']
    #allocation7 [shape = 'u8[4096]{0}', space=vmem, size = 0x1000, scoped, tag = 'output window, operand 0, single buffered']
    %7 = vsyncpa [#allocation3], 0
    %8 = vsyncpa [#allocation6], 0
    %9 = vsyncpa [#allocation4], 0
    // Predicated region
    $region2: #{tpu_custom_call.1} parent=1 // pred_check
      _
    $region3: #{tpu_custom_call.1} parent=1 // pred_check_branch
      %11 = sbr.rel (0) target = $region5
    $region4: #{tpu_custom_call.1} parent=1 // pred_region
      %13 = vsyncadd [#allocation3], 0
      %s15 = sshll.u32 %s0, 4
      %s16 = int_to_ptr.hbm [resolvable:$true] %s15
      %s17 = sshll.u32 [#allocation2], 4
      %s18 = int_to_ptr.vmem [resolvable:$true] %s17
      %20 = dma.hbm_to_vmem [thread:$0]  %s16, 256, %s18, [#allocation3]
    $region5: #{tpu_custom_call.1} parent=1 // pred_fallthru
      _
    // Predicated region
    $region6: #{tpu_custom_call.1} parent=1 // pred_check
      _
    $region7: #{tpu_custom_call.1} parent=1 // pred_check_branch
      %22 = sbr.rel (0) target = $region9
    $region8: #{tpu_custom_call.1} parent=1 // pred_region
      %24 = vsyncadd [#allocation6], 0
      %s26 = sshll.u32 %s1, 4
      %s27 = int_to_ptr.hbm [resolvable:$true] %s26
      %s28 = sshll.u32 [#allocation5], 4
      %s29 = int_to_ptr.vmem [resolvable:$true] %s28
      %31 = dma.hbm_to_vmem [thread:$0]  %s27, 256, %s29, [#allocation6]
    $region9: #{tpu_custom_call.1} parent=1 // pred_fallthru
      _
    // Predicated region
    $region10: #{tpu_custom_call.1} parent=1 // pred_check
      _
    $region11: #{tpu_custom_call.1} parent=1 // pred_check_branch
      %33 = sbr.rel (0) target = $region13
    $region12: #{tpu_custom_call.1} parent=1 // pred_region
      %35 = dma.done [#allocation3], 256
    $region13: #{tpu_custom_call.1} parent=1 // pred_fallthru
      _
    // Predicated region
    $region14: #{tpu_custom_call.1} parent=1 // pred_check
      _
    $region15: #{tpu_custom_call.1} parent=1 // pred_check_branch
      %37 = sbr.rel (0) target = $region17
    $region16: #{tpu_custom_call.1} parent=1 // pred_region
      %39 = dma.done [#allocation6], 256
    $region17: #{tpu_custom_call.1} parent=1 // pred_fallthru
      _
    %v40 = vld [vmem:[#allocation2] sm:$0xff]
    %v41 = vld [vmem:[#allocation2 + $0x8] sm:$0xff]
    %v42 = vld [vmem:[#allocation5] sm:$0xff]
    %v43 = vld [vmem:[#allocation5 + $0x8] sm:$0xff]
    %v44 = vmul.f32 %v42, %v40
    %v45 = vmul.f32 %v43, %v41
    %v46 = vadd.f32 %v42, %v40
    %v47 = vadd.f32 %v43, %v41
    %50 = vst [vmem:[#allocation1] ss:$2 sm:$0xff] %v44
    %s51 = scalar_lea.vmem [#allocation1], 16
    %52 = vst [vmem:[%s51] ss:$2 sm:$0xff] %v45
    %v53 = vld.sshfl [vmem:[#allocation1] sm:$0xff pattern:$0x75316420]
    %v54 = vld.sshfl [vmem:[#allocation1 + $0x8] sm:$0xff pattern:$0x75316420]
    %v55 = vld.sshfl [vmem:[#allocation1 + $0x10] sm:$0xff pattern:$0x75316420]
    %v56 = vld.sshfl [vmem:[#allocation1 + $0x18] sm:$0xff pattern:$0x75316420]
    %vm61 = vcmask 1043456
    %v62 = vsel %vm61, %v53, 0.0
    %v63 = vsel %vm61, %v54, 0.0
    %v64 = vadd.f32 %v62, %v63
    %v65 = vsel %vm61, %v55, 0.0
    %v66 = vadd.f32 %v64, %v65
    %v67 = vsel %vm61, %v56, 0.0
    %v68 = vadd.f32 %v66, %v67
    %69 = vadd.xlane.f32.xlu0 %v68
    %v70 = vpop.xlane.xlu0 %69
    %v71 = vrot.slane %v70, 4
    %v72 = vadd.f32 %v70, %v71
    %v73 = vrot.slane %v72, 2
    %v74 = vadd.f32 %v72, %v73
    %v75 = vrot.slane %v74, 1
    %v76 = vadd.f32 %v74, %v75
    %s77 = vtos %v76
    %s78 = sadd.f32 %s77, 0.0
    %81 = vst [vmem:[#allocation1] ss:$2 sm:$0xff] %v46
    %s82 = scalar_lea.vmem [#allocation1], 16
    %83 = vst [vmem:[%s82] ss:$2 sm:$0xff] %v47
    %v84 = vld.sshfl [vmem:[#allocation1] sm:$0xff pattern:$0x75316420]
    %v85 = vld.sshfl [vmem:[#allocation1 + $0x8] sm:$0xff pattern:$0x75316420]
    %v86 = vld.sshfl [vmem:[#allocation1 + $0x10] sm:$0xff pattern:$0x75316420]
    %v87 = vld.sshfl [vmem:[#allocation1 + $0x18] sm:$0xff pattern:$0x75316420]
    %v92 = vsel %vm61, %v84, 0.0
    %v93 = vsel %vm61, %v85, 0.0
    %v94 = vadd.f32 %v92, %v93
    %v95 = vsel %vm61, %v86, 0.0
    %v96 = vadd.f32 %v94, %v95
    %v97 = vsel %vm61, %v87, 0.0
    %v98 = vadd.f32 %v96, %v97
    %99 = vadd.xlane.f32.xlu0 %v98
    %v100 = vpop.xlane.xlu0 %99
    %v101 = vrot.slane %v100, 4
    %v102 = vadd.f32 %v100, %v101
    %v103 = vrot.slane %v102, 2
    %v104 = vadd.f32 %v102, %v103
    %v105 = vrot.slane %v104, 1
    %v106 = vadd.f32 %v104, %v105
    %s107 = vtos %v106
    %s108 = sadd.f32 %s107, 0.0
    %v109 = vlaneseq
    %v110 = vshrl.u32 %v109, 7
    %vm111 = vcmp.eq.s32.totalorder %v110, 0
    %vm112 = vcmp.eq.s32.totalorder %v110, 1
    %v113 = vstv %s108
    %v114 = vsel %vm112, %v113, 0.0
    %v115 = vstv %s78
    %v116 = vsel %vm111, %v115, %v114
    %117 = vst [vmem:[#allocation7] sm:$0xff] %v116
    // Predicated region
    $region18: #{tpu_custom_call.1} parent=1 // pred_check
      _
    $region19: #{tpu_custom_call.1} parent=1 // pred_check_branch
      %119 = sbr.rel (0) target = $region21
    $region20: #{tpu_custom_call.1} parent=1 // pred_region
      %121 = vsyncadd [#allocation4], 0
      %s123 = sshll.u32 [#allocation7], 4
      %s124 = int_to_ptr.vmem [resolvable:$true] %s123
      %s125 = sshll.u32 %s2, 4
      %s126 = int_to_ptr.hbm [resolvable:$true] %s125
      %128 = dma.vmem_to_hbm [thread:$0]  %s124, 128, %s126, [#allocation4]
    $region21: #{tpu_custom_call.1} parent=1 // pred_fallthru
      _
    // Predicated region
    $region22: #{tpu_custom_call.1} parent=1 // pred_check
      _
    $region23: #{tpu_custom_call.1} parent=1 // pred_check_branch
      %130 = sbr.rel (0) target = $region25
    $region24: #{tpu_custom_call.1} parent=1 // pred_region
      %132 = dma.done [#allocation4], 128
    $region25: #{tpu_custom_call.1} parent=1 // pred_fallthru
      _
    %133 = vsyncpa [#allocation3], 1
    %134 = vsyncpa [#allocation6], 1
    %135 = vsyncpa [#allocation4], 1

</llo_original>
